<compile_context>
chip_gen: v5e
topology: v5e:2x2
jax: 0.10.0
libtpu: 0.0.40
codegen_flags: <defaults>
</compile_context>

<pallas_src>
import jax
import jax.numpy as jnp
from jax.experimental import pallas as pl
from jax.experimental.pallas import tpu as pltpu

_LANE = 128      # vreg lane width
_SUBLANE = 8     # vreg sublane depth


def linreg_kernel(w_ref, b_ref, x_ref, o_ref):
    """y = x * w + b as a pure VPU fused multiply-add.

    w_ref / b_ref: (1, 1) scalars in SMEM.
    x_ref / o_ref: (TM, 128) lane-dense VMEM tiles (samples along the lane axis).
    """
    w = w_ref[0, 0]
    b = b_ref[0, 0]
    o_ref[...] = x_ref[...] * w + b


def linear_regression_forward(x, weight, bias, *, row_tile=512):
    """Pallas equivalent of LinearRegression.forward (nn.Linear(1, 1))."""
    n, in_f = x.shape
    out_f = weight.shape[0]
    assert in_f == 1 and out_f == 1, "kernel specialised to nn.Linear(1, 1)"

    # Lay samples out lane-dense: (rows, 128); rows padded to a multiple of the
    # sublane depth (8) and of the row tile so every block is a fully aligned
    # (TM, 128) tile -> unmasked vld/vst, no partially-filled vregs.
    rows = -(-n // _LANE)
    rows = -(-rows // _SUBLANE) * _SUBLANE
    tm = min(rows, row_tile)          # row_tile=512 fits comfortably in 64 MiB VMEM (v7x)
    rows = -(-rows // tm) * tm
    total = rows * _LANE

    x_flat = jnp.zeros((total,), jnp.float32).at[:n].set(
        x.reshape(-1).astype(jnp.float32))
    x2d = x_flat.reshape(rows, _LANE)

    w2d = weight.reshape(1, 1).astype(jnp.float32)
    b2d = bias.reshape(1, 1).astype(jnp.float32)

    y2d = pl.pallas_call(
        linreg_kernel,
        out_shape=jax.ShapeDtypeStruct((rows, _LANE), jnp.float32),
        grid=(rows // tm,),
        in_specs=[
            pl.BlockSpec(memory_space=pltpu.MemorySpace.SMEM),   # weight (1,1)
            pl.BlockSpec(memory_space=pltpu.MemorySpace.SMEM),   # bias   (1,1)
            pl.BlockSpec((tm, _LANE), lambda i: (i, 0)),         # X tile
        ],
        out_specs=pl.BlockSpec((tm, _LANE), lambda i: (i, 0)),
        compiler_params=pltpu.CompilerParams(
            dimension_semantics=("parallel",),                   # shards rows across TCs (v7x)
        ),
        cost_estimate=pl.CostEstimate(
            flops=2 * total, transcendentals=0, bytes_accessed=8 * total + 8),
    )(w2d, b2d, x2d)

    # Undo the lane-dense packing: back to (N, 1), matching nn.Linear output.
    return y2d.reshape(-1)[:n].reshape(n, out_f)


if __name__ == "__main__":
    # Same input as the PyTorch script: X = torch.arange(0, 1, 0.02).unsqueeze(1)
    X = jnp.arange(0.0, 1.0, 0.02, dtype=jnp.float32).reshape(-1, 1)  # (50, 1)

    # Deterministic parameter init for nn.Linear(1, 1)
    key = jax.random.PRNGKey(0)
    kw, kb = jax.random.split(key)
    bound = 1.0  # uniform(-1/sqrt(in_f), +1/sqrt(in_f)) with in_features = 1
    weight = jax.random.uniform(kw, (1, 1), jnp.float32, -bound, bound)
    bias = jax.random.uniform(kb, (1,), jnp.float32, -bound, bound)

    y = linear_regression_forward(X, weight, bias)
    y = jax.block_until_ready(y)

    # Correctness check against plain-JAX reference (nn.Linear semantics)
    y_ref = X @ weight.T + bias
    assert y.shape == (50, 1)
    assert jnp.allclose(y, y_ref, atol=1e-6), "mismatch vs reference"

    print("KERNEL_OK")
</pallas_src>

<mosaic_0001>
module attributes {stable_mosaic.version = 11 : i64} {
  func.func @linreg_kernel(%arg0: i32, %arg1: memref<1x1xf32, #tpu.memory_space<smem>>, %arg2: memref<1x1xf32, #tpu.memory_space<smem>>, %arg3: memref<8x128xf32, #tpu.memory_space<vmem>>, %arg4: memref<8x128xf32, #tpu.memory_space<vmem>>) attributes {dimension_semantics = [#tpu.dimension_semantics<parallel>], iteration_bounds = array<i64: 1>, scalar_prefetch = 0 : i64, scratch_operands = 0 : i64, tpu.core_type = #tpu.core_type<tc>, window_params = [{transform_indices = @transform_0, window_bounds = array<i64: 1, 1>}, {transform_indices = @transform_1, window_bounds = array<i64: 1, 1>}, {transform_indices = @transform_2, window_bounds = array<i64: 8, 128>}, {transform_indices = @transform_3, window_bounds = array<i64: 8, 128>}]} {
    %c0 = arith.constant 0 : index
    %c0_0 = arith.constant 0 : index
    %0 = memref.load %arg1[%c0, %c0_0] : memref<1x1xf32, #tpu.memory_space<smem>>
    %c0_1 = arith.constant 0 : index
    %c0_2 = arith.constant 0 : index
    %1 = memref.load %arg2[%c0_1, %c0_2] : memref<1x1xf32, #tpu.memory_space<smem>>
    %c0_3 = arith.constant 0 : index
    %c0_4 = arith.constant 0 : index
    %2 = vector.load %arg3[%c0_3, %c0_4] : memref<8x128xf32, #tpu.memory_space<vmem>>, vector<8x128xf32>
    %3 = vector.broadcast %0 : f32 to vector<8x128xf32>
    %4 = arith.mulf %2, %3 : vector<8x128xf32>
    %5 = vector.broadcast %1 : f32 to vector<8x128xf32>
    %6 = arith.addf %4, %5 : vector<8x128xf32>
    %c0_5 = arith.constant 0 : index
    %c0_6 = arith.constant 0 : index
    %7 = vector.load %arg4[%c0_5, %c0_6] : memref<8x128xf32, #tpu.memory_space<vmem>>, vector<8x128xf32>
    tpu.vector_store %arg4[%c0_5, %c0_6], %6 {strides = array<i32>} : memref<8x128xf32, #tpu.memory_space<vmem>>, vector<8x128xf32>,
    return
  }
  func.func @transform_0(%arg0: i32) -> (i32, i32) {
    %c0_i32 = arith.constant 0 : i32
    %c0_i32_0 = arith.constant 0 : i32
    %c0_i32_1 = arith.constant 0 : i32
    return %c0_i32, %c0_i32_0 : i32, i32
  }
  func.func @transform_1(%arg0: i32) -> (i32, i32) {
    %c0_i32 = arith.constant 0 : i32
    %c0_i32_0 = arith.constant 0 : i32
    %c0_i32_1 = arith.constant 0 : i32
    return %c0_i32, %c0_i32_0 : i32, i32
  }
  func.func @transform_2(%arg0: i32) -> (i32, i32) {
    %c0_i32 = arith.constant 0 : i32
    %c0_i32_0 = arith.constant 0 : i32
    return %arg0, %c0_i32 : i32, i32
  }
  func.func @transform_3(%arg0: i32) -> (i32, i32) {
    %c0_i32 = arith.constant 0 : i32
    %c0_i32_0 = arith.constant 0 : i32
    return %arg0, %c0_i32 : i32, i32
  }
}

</mosaic_0001>

<llo_original>
// kernel: tpu_custom_call.1
$region0: #{tpu_custom_call.1}
  #allocation0 [shape = 'u32[]', space=smem, size = 0x4, offset = 0x4, fixed_abs, tag = 'smem constant byte address 0x4 - core index']
  #allocation1 [shape = 'u32[72,128]{1,0:T(1,128)}', space=vmem, size = 0x9000, scoped, tag = 'internal scratch']
  #allocation2 [shape = 'f32[1,1]{1,0:T(1,128)S(6)}', space=smem, size = 0x200, scoped, tag = 'scoped memory for tpu_custom_call.1']
  #allocation3 [shape = 'f32[1,1]{1,0:T(1,128)S(6)}', space=smem, size = 0x200, scoped, tag = 'scoped memory for tpu_custom_call.1']
  %s0 = inlined_call_operand.<no memory space> [shape: f32[1,1], index: 0, kind: input, shape index: {}]
  %s1 = inlined_call_operand.<no memory space> [shape: f32[1,1], index: 1, kind: input, shape index: {}]
  %s2 = inlined_call_operand.hbm [shape: f32[8,128], index: 2, kind: input, shape index: {}]
  %s3 = inlined_call_operand.hbm [shape: f32[8,128], index: 3, kind: output, shape index: {}]
  %s4 = sld [smem:[#allocation0]]
  $region26: #{tpu_custom_call.1} parent=0
    _
  %s6 = ssub.s32 1, %s4
  %s7 = scalar_select 0, %s6, %s4
  %8 = sst [smem:[#allocation2]] %s0
  %9 = sst [smem:[#allocation3]] %s1
  $region1: #{tpu_custom_call.1} parent=0
    #allocation4 [shape = 'u8[4096]{0}', space=vmem, size = 0x1000, scoped, tag = 'input window, operand 2, single buffered']
    #allocation5 [shape = 's32[1]{0}', space=sflag, size = 0x4, scoped, tag = 'scoped memory for tpu_custom_call.1']
    #allocation6 [shape = 's32[1]{0}', space=sflag, size = 0x4, scoped, tag = 'scoped memory for tpu_custom_call.1']
    #allocation7 [shape = 'u8[4096]{0}', space=vmem, size = 0x1000, scoped, tag = 'output window, operand 0, single buffered']
    %10 = vsyncpa [#allocation5], 0
    %11 = vsyncpa [#allocation6], 0
    // Predicated region
    $region2: #{tpu_custom_call.1} parent=1 // pred_check
      _
    $region3: #{tpu_custom_call.1} parent=1 // pred_check_branch
      %13 = sbr.rel (0) target = $region5
    $region4: #{tpu_custom_call.1} parent=1 // pred_region
      _
    $region5: #{tpu_custom_call.1} parent=1 // pred_fallthru
      _
    // Predicated region
    $region6: #{tpu_custom_call.1} parent=1 // pred_check
      _
    $region7: #{tpu_custom_call.1} parent=1 // pred_check_branch
      %15 = sbr.rel (0) target = $region9
    $region8: #{tpu_custom_call.1} parent=1 // pred_region
      _
    $region9: #{tpu_custom_call.1} parent=1 // pred_fallthru
      _
    // Predicated region
    $region10: #{tpu_custom_call.1} parent=1 // pred_check
      _
    $region11: #{tpu_custom_call.1} parent=1 // pred_check_branch
      %17 = sbr.rel (0) target = $region13
    $region12: #{tpu_custom_call.1} parent=1 // pred_region
      %19 = vsyncadd [#allocation5], 0
      %s21 = sshll.u32 %s2, 4
      %s22 = int_to_ptr.hbm [resolvable:$true] %s21
      %s23 = sshll.u32 [#allocation4], 4
      %s24 = int_to_ptr.vmem [resolvable:$true] %s23
      %26 = dma.hbm_to_vmem [thread:$0]  %s22, 128, %s24, [#allocation5]
    $region13: #{tpu_custom_call.1} parent=1 // pred_fallthru
      _
    // Predicated region
    $region14: #{tpu_custom_call.1} parent=1 // pred_check
      _
    $region15: #{tpu_custom_call.1} parent=1 // pred_check_branch
      %28 = sbr.rel (0) target = $region17
    $region16: #{tpu_custom_call.1} parent=1 // pred_region
      %30 = dma.done [#allocation5], 128
    $region17: #{tpu_custom_call.1} parent=1 // pred_fallthru
      _
    %s31 = sld [smem:[#allocation2]]
    %s32 = sld [smem:[#allocation3]]
    %v33 = vld [vmem:[#allocation4] sm:$0xff]
    %v34 = vstv %s31
    %v35 = vmul.f32 %v33, %v34
    %v36 = vstv %s32
    %v37 = vadd.f32 %v35, %v36
    %38 = vst [vmem:[#allocation7] sm:$0xff] %v37
    // Predicated region
    $region18: #{tpu_custom_call.1} parent=1 // pred_check
      _
    $region19: #{tpu_custom_call.1} parent=1 // pred_check_branch
      %40 = sbr.rel (0) target = $region21
    $region20: #{tpu_custom_call.1} parent=1 // pred_region
      %42 = vsyncadd [#allocation6], 0
      %s44 = sshll.u32 [#allocation7], 4
      %s45 = int_to_ptr.vmem [resolvable:$true] %s44
      %s46 = sshll.u32 %s3, 4
      %s47 = int_to_ptr.hbm [resolvable:$true] %s46
      %49 = dma.vmem_to_hbm [thread:$0]  %s45, 128, %s47, [#allocation6]
    $region21: #{tpu_custom_call.1} parent=1 // pred_fallthru
      _
    // Predicated region
    $region22: #{tpu_custom_call.1} parent=1 // pred_check
      _
    $region23: #{tpu_custom_call.1} parent=1 // pred_check_branch
      %51 = sbr.rel (0) target = $region25
    $region24: #{tpu_custom_call.1} parent=1 // pred_region
      %53 = dma.done [#allocation6], 128
    $region25: #{tpu_custom_call.1} parent=1 // pred_fallthru
      _
    %54 = vsyncpa [#allocation5], 1
    %55 = vsyncpa [#allocation6], 1

</llo_original>
